<compile_context>
chip_gen: v6e
topology: v6e:2x2x1
jax: 0.10.0
libtpu: 0.0.40
codegen_flags: <defaults>
</compile_context>

<pallas_src>
import functools

import jax
import jax.numpy as jnp
import numpy as np
from jax.experimental import pallas as pl
from jax.experimental.pallas import tpu as pltpu

_LANES = 128
_SUBLANES = 8
_MAX_SB = 256                    # 256 sublanes x 128 lanes = 32768 batch elems / grid step
_VMEM_BUDGET = 3 * 512 * 1024    # ~1.5 MiB of logits per pipeline buffer
_UNROLL_C = 16                   # unroll the class loop for ordinal-size C


def _round_up(x, m):
    return ((x + m - 1) // m) * m


def _cdiv(a, b):
    return (a + b - 1) // b


def _owce_kernel(logits_ref, targets_ref, wpow_ref, out_ref, *, batch_size):
    """One batch tile.

    logits_ref : (C, SB, 128)  native dtype (upcast to f32 on-chip)
    targets_ref: (SB, 128)     int32
    wpow_ref   : (C,)          f32 in SMEM; wpow[k] = ordinal_weights[0] ** k
    out_ref    : (1, 8, 128)   f32 partial sums of the weighted loss
    """
    C, SB, L = logits_ref.shape
    t = targets_ref[...]                                       # (SB, 128) int32

    # Validity mask: padded lanes and the garbage region of a partial trailing
    # block have a global batch index >= batch_size and are zeroed before the sum.
    row = pl.program_id(0) * SB + jax.lax.broadcasted_iota(jnp.int32, (SB, L), 0)
    lane = jax.lax.broadcasted_iota(jnp.int32, (SB, L), 1)
    valid = row * L + lane < batch_size

    if C <= _UNROLL_C:
        # Each class plane is a packed (SB, 128) tile; read once.
        planes = [logits_ref[c].astype(jnp.float32) for c in range(C)]

        row_max = planes[0]
        for c in range(1, C):
            row_max = jnp.maximum(row_max, planes[c])

        # One fused descending sweep: sum-exp + target gather + first-max argmax.
        sum_exp = jnp.zeros((SB, L), jnp.float32)
        tgt_logit = jnp.zeros((SB, L), jnp.float32)
        pred = jnp.zeros((SB, L), jnp.int32)
        for c in range(C - 1, -1, -1):
            xc = planes[c]
            sum_exp = sum_exp + jnp.exp(xc - row_max)
            tgt_logit = jnp.where(t == c, xc, tgt_logit)
            pred = jnp.where(xc == row_max, jnp.int32(c), pred)   # NaN rows -> 0

        dist = jnp.abs(pred - t)                                  # in [0, C-1]
        # Ordinal weight = base ** dist as a pure select over precomputed powers.
        w = jnp.full((SB, L), wpow_ref[0], jnp.float32)
        for k in range(1, C):
            w = jnp.where(dist == k, wpow_ref[k], w)
    else:
        # General-C fallback: cross-plane reductions (batch still fully packed).
        # TODO(synk): for vocab-scale C, add a second ("arbitrary") grid axis over C
        # with an online logsumexp / running argmax instead of one full-C block.
        x = logits_ref[...].astype(jnp.float32)                   # (C, SB, 128)
        cidx = jax.lax.broadcasted_iota(jnp.int32, x.shape, 0)
        row_max = jnp.max(x, axis=0)
        sum_exp = jnp.sum(jnp.exp(x - row_max[None]), axis=0)
        tgt_logit = jnp.sum(jnp.where(cidx == t[None], x, 0.0), axis=0)
        pred = jnp.min(jnp.where(x == row_max[None], cidx, C), axis=0)
        pred = jnp.minimum(pred, C - 1)                           # NaN rows stay in range

        dist = jnp.abs(pred - t)
        # Exact integer-exponent power (valid for base <= 0 too): binary exponentiation.
        w = jnp.ones((SB, L), jnp.float32)
        p = jnp.full((SB, L), wpow_ref[1], jnp.float32)
        d = dist
        for _ in range(max(1, (C - 1).bit_length())):
            w = jnp.where((d & 1) == 1, w * p, w)
            p = p * p
            d = jnp.right_shift(d, 1)

    base_loss = jnp.log(sum_exp) + row_max - tgt_logit            # CE, reduction='none'
    wl = jnp.where(valid, base_loss * w, 0.0)                     # (SB, 128)

    # Reduce SB sublane-groups of 8 with pure vreg adds -> packed (8, 128) partial.
    part = wl[0:_SUBLANES, :]
    for g in range(1, SB // _SUBLANES):
        part = part + wl[g * _SUBLANES:(g + 1) * _SUBLANES, :]
    out_ref[...] = part[None]


def _pick_sb(nb, C, itemsize):
    """Sublane rows per grid step: multiple of 8, VMEM-budgeted, >= 2 blocks when big."""
    budget_rows = max(
        _SUBLANES,
        (_VMEM_BUDGET // (C * _LANES * itemsize)) // _SUBLANES * _SUBLANES)
    sb = min(_MAX_SB, budget_rows)
    if nb >= 2 * _SUBLANES:
        # Keep at least two grid blocks so v7x's two TensorCores both get work.
        sb = min(sb, _round_up(_cdiv(nb, 2), _SUBLANES))
    return max(_SUBLANES, min(sb, _round_up(nb, _SUBLANES)))


def ordinal_weighted_ce_loss(logits, targets, ordinal_weights):
    """JAX/Pallas equivalent of OrdinalWeightedCELoss.forward (mean-reduced)."""
    # TODO(synk): forward only — pallas_call is not differentiable by default; for
    # training, wrap with jax.custom_vjp using a pure-JAX backward.
    if targets.ndim > 1:                      # matches `targets = targets[:, 0]`
        targets = targets[:, 0]
    B, C = logits.shape
    itemsize = jnp.dtype(logits.dtype).itemsize

    B_pad = _round_up(B, _SUBLANES * _LANES)  # minimal pad (<= 1023 elements)
    nb = B_pad // _LANES                      # packed batch rows (multiple of 8)
    SB = _pick_sb(nb, C, itemsize)
    num_blocks = _cdiv(nb, SB)                # trailing partial block masked in-kernel

    # Class-major (C, nb, 128) relayout: batch packed over sublanes x lanes, native dtype.
    # TODO(synk): if the producer can emit class-major logits directly, this transpose
    # copy (the only extra HBM pass left) disappears.
    logits_3d = jnp.pad(jnp.transpose(logits),
                        ((0, 0), (0, B_pad - B))).reshape(C, nb, _LANES)
    targets_2d = jnp.pad(targets.astype(jnp.int32), (0, B_pad - B)).reshape(nb, _LANES)

    # Exact base**k table (repeated multiplication matches torch.pow for integer
    # exponents, including base <= 0 and 0**0 == 1).
    base = ordinal_weights[0].astype(jnp.float32)
    wpow = jnp.cumprod(jnp.concatenate(
        [jnp.ones((1,), jnp.float32), jnp.full((C - 1,), base, jnp.float32)]))

    cost = pl.CostEstimate(
        flops=12 * B_pad * C,
        transcendentals=B_pad * (C + 1),
        bytes_accessed=B_pad * C * itemsize + B_pad * 4
                       + num_blocks * _SUBLANES * _LANES * 4,
    )

    partials = pl.pallas_call(
        functools.partial(_owce_kernel, batch_size=B),
        out_shape=jax.ShapeDtypeStruct((num_blocks, _SUBLANES, _LANES), jnp.float32),
        grid=(num_blocks,),
        in_specs=[
            pl.BlockSpec((C, SB, _LANES), lambda i: (0, i, 0)),   # logits tile  (VMEM)
            pl.BlockSpec((SB, _LANES), lambda i: (i, 0)),         # targets tile (VMEM)
            pl.BlockSpec(memory_space=pltpu.SMEM),                # base**k table
        ],
        out_specs=pl.BlockSpec((1, _SUBLANES, _LANES), lambda i: (i, 0, 0)),
        compiler_params=pltpu.CompilerParams(
            dimension_semantics=("parallel",),
        ),
        cost_estimate=cost,
    )(logits_3d, targets_2d, wpow)

    return jnp.sum(partials) / B


def _reference(logits, targets, ordinal_weights):
    """Pure-JAX reference mirroring the PyTorch module."""
    if targets.ndim > 1:
        targets = targets[:, 0]
    tgt = targets.astype(jnp.int32)
    logp = jax.nn.log_softmax(logits.astype(jnp.float32), axis=1)
    base_loss = -jnp.take_along_axis(logp, tgt[:, None], axis=1)[:, 0]
    pred = jnp.argmax(logits, axis=1).astype(jnp.int32)
    dist = jnp.abs(pred - tgt).astype(jnp.float32)
    w = jnp.power(ordinal_weights[0].astype(jnp.float32), dist)
    return jnp.mean(base_loss * w)


if __name__ == "__main__":
    key = jax.random.PRNGKey(0)
    k1, k2, k3, k4, k5, k6 = jax.random.split(key, 6)

    owce = jax.jit(ordinal_weighted_ce_loss)

    # Case 1: module defaults (class_labels_num=3, ordinal_weights=[1,2,4]), 1-D targets.
    B1, C1 = 8, 3
    logits1 = jax.random.normal(k1, (B1, C1), dtype=jnp.float32)
    targets1 = jax.random.randint(k2, (B1,), 0, C1, dtype=jnp.int32)
    ow1 = jnp.array([1.0, 2.0, 4.0], dtype=jnp.float32)
    loss1 = jax.block_until_ready(owce(logits1, targets1, ow1))
    ref1 = jax.block_until_ready(_reference(logits1, targets1, ow1))
    assert np.allclose(np.asarray(loss1), np.asarray(ref1), rtol=1e-5, atol=1e-5), (loss1, ref1)

    # Case 2: multi-block grid + masked partial trailing block, 2-D targets, base=2.
    B2, C2 = 5000, 3
    logits2 = jax.random.normal(k3, (B2, C2), dtype=jnp.float32)
    targets2 = jax.random.randint(k4, (B2, 1), 0, C2, dtype=jnp.int32)
    ow2 = jnp.array([2.0, 2.0, 4.0], dtype=jnp.float32)
    loss2 = jax.block_until_ready(owce(logits2, targets2, ow2))
    ref2 = jax.block_until_ready(_reference(logits2, targets2, ow2))
    assert np.allclose(np.asarray(loss2), np.asarray(ref2), rtol=1e-4, atol=1e-5), (loss2, ref2)

    # Case 3: bf16 logits streamed at native dtype (upcast on-chip), C=5.
    B3, C3 = 300, 5
    logits3 = jax.random.normal(k5, (B3, C3), dtype=jnp.bfloat16)
    targets3 = jax.random.randint(k6, (B3,), 0, C3, dtype=jnp.int32)
    ow3 = jnp.array([1.5, 1.0, 1.0, 1.0, 1.0], dtype=jnp.float32)
    loss3 = jax.block_until_ready(owce(logits3, targets3, ow3))
    ref3 = jax.block_until_ready(_reference(logits3, targets3, ow3))
    assert np.allclose(np.asarray(loss3), np.asarray(ref3), rtol=1e-4, atol=1e-4), (loss3, ref3)

    print("KERNEL_OK")
</pallas_src>

<mosaic_0001>
module attributes {stable_mosaic.version = 11 : i64} {
  func.func @_owce_kernel(%arg0: i32, %arg1: memref<3x8x128xf32, #tpu.memory_space<vmem>>, %arg2: memref<8x128xi32, #tpu.memory_space<vmem>>, %arg3: memref<3xf32, #tpu.memory_space<smem>>, %arg4: memref<1x8x128xf32, #tpu.memory_space<vmem>>) attributes {dimension_semantics = [#tpu.dimension_semantics<parallel>], iteration_bounds = array<i64: 1>, scalar_prefetch = 0 : i64, scratch_operands = 0 : i64, tpu.core_type = #tpu.core_type<tc>, window_params = [{transform_indices = @transform_0, window_bounds = array<i64: 3, 8, 128>}, {transform_indices = @transform_1, window_bounds = array<i64: 8, 128>}, {transform_indices = @transform_2, window_bounds = array<i64: 3>}, {transform_indices = @transform_3, window_bounds = array<i64: 1, 8, 128>}]} {
    %c0 = arith.constant 0 : index
    %c0_0 = arith.constant 0 : index
    %0 = vector.load %arg2[%c0, %c0_0] : memref<8x128xi32, #tpu.memory_space<vmem>>, vector<8x128xi32>
    %c8_i32 = arith.constant 8 : i32
    %1 = arith.muli %arg0, %c8_i32 : i32
    %2 = tpu.iota {dimensions = array<i32: 0>} : vector<8x128xi32>
    %3 = vector.broadcast %1 : i32 to vector<8x128xi32>
    %4 = arith.addi %3, %2 : vector<8x128xi32>
    %5 = tpu.iota {dimensions = array<i32: 1>} : vector<8x128xi32>
    %c128_i32 = arith.constant 128 : i32
    %6 = vector.broadcast %c128_i32 : i32 to vector<8x128xi32>
    %7 = arith.muli %4, %6 : vector<8x128xi32>
    %8 = arith.addi %7, %5 : vector<8x128xi32>
    %c8_i32_1 = arith.constant 8 : i32
    %9 = vector.broadcast %c8_i32_1 : i32 to vector<8x128xi32>
    %10 = arith.cmpi slt, %8, %9 : vector<8x128xi32>
    %c0_2 = arith.constant 0 : index
    %c0_3 = arith.constant 0 : index
    %c0_4 = arith.constant 0 : index
    %11 = vector.load %arg1[%c0_2, %c0_3, %c0_4] : memref<3x8x128xf32, #tpu.memory_space<vmem>>, vector<1x8x128xf32>
    %12 = vector.shape_cast %11 : vector<1x8x128xf32> to vector<8x128xf32>
    %c1 = arith.constant 1 : index
    %c0_5 = arith.constant 0 : index
    %c0_6 = arith.constant 0 : index
    %13 = vector.load %arg1[%c1, %c0_5, %c0_6] : memref<3x8x128xf32, #tpu.memory_space<vmem>>, vector<1x8x128xf32>
    %14 = vector.shape_cast %13 : vector<1x8x128xf32> to vector<8x128xf32>
    %c2 = arith.constant 2 : index
    %c0_7 = arith.constant 0 : index
    %c0_8 = arith.constant 0 : index
    %15 = vector.load %arg1[%c2, %c0_7, %c0_8] : memref<3x8x128xf32, #tpu.memory_space<vmem>>, vector<1x8x128xf32>
    %16 = vector.shape_cast %15 : vector<1x8x128xf32> to vector<8x128xf32>
    %17 = arith.maximumf %12, %14 : vector<8x128xf32>
    %18 = arith.maximumf %17, %16 : vector<8x128xf32>
    %cst = arith.constant 0.000000e+00 : f32
    %19 = vector.broadcast %cst : f32 to vector<8x128xf32>
    %cst_9 = arith.constant 0.000000e+00 : f32
    %20 = vector.broadcast %cst_9 : f32 to vector<8x128xf32>
    %c0_i32 = arith.constant 0 : i32
    %21 = vector.broadcast %c0_i32 : i32 to vector<8x128xi32>
    %22 = arith.subf %16, %18 : vector<8x128xf32>
    %23 = math.exp %22 : vector<8x128xf32>
    %24 = arith.addf %19, %23 : vector<8x128xf32>
    %c2_i32 = arith.constant 2 : i32
    %25 = vector.broadcast %c2_i32 : i32 to vector<8x128xi32>
    %26 = arith.cmpi eq, %0, %25 : vector<8x128xi32>
    %27 = arith.select %26, %16, %20 : vector<8x128xi1>, vector<8x128xf32>
    %28 = arith.cmpf oeq, %16, %18 : vector<8x128xf32>
    %c2_i32_10 = arith.constant 2 : i32
    %29 = vector.broadcast %c2_i32_10 : i32 to vector<8x128xi32>
    %30 = arith.select %28, %29, %21 : vector<8x128xi1>, vector<8x128xi32>
    %31 = arith.subf %14, %18 : vector<8x128xf32>
    %32 = math.exp %31 : vector<8x128xf32>
    %33 = arith.addf %24, %32 : vector<8x128xf32>
    %c1_i32 = arith.constant 1 : i32
    %34 = vector.broadcast %c1_i32 : i32 to vector<8x128xi32>
    %35 = arith.cmpi eq, %0, %34 : vector<8x128xi32>
    %36 = arith.select %35, %14, %27 : vector<8x128xi1>, vector<8x128xf32>
    %37 = arith.cmpf oeq, %14, %18 : vector<8x128xf32>
    %c1_i32_11 = arith.constant 1 : i32
    %38 = vector.broadcast %c1_i32_11 : i32 to vector<8x128xi32>
    %39 = arith.select %37, %38, %30 : vector<8x128xi1>, vector<8x128xi32>
    %40 = arith.subf %12, %18 : vector<8x128xf32>
    %41 = math.exp %40 : vector<8x128xf32>
    %42 = arith.addf %33, %41 : vector<8x128xf32>
    %c0_i32_12 = arith.constant 0 : i32
    %43 = vector.broadcast %c0_i32_12 : i32 to vector<8x128xi32>
    %44 = arith.cmpi eq, %0, %43 : vector<8x128xi32>
    %45 = arith.select %44, %12, %36 : vector<8x128xi1>, vector<8x128xf32>
    %46 = arith.cmpf oeq, %12, %18 : vector<8x128xf32>
    %c0_i32_13 = arith.constant 0 : i32
    %47 = vector.broadcast %c0_i32_13 : i32 to vector<8x128xi32>
    %48 = arith.select %46, %47, %39 : vector<8x128xi1>, vector<8x128xi32>
    %49 = arith.subi %48, %0 : vector<8x128xi32>
    %50 = math.absi %49 : vector<8x128xi32>
    %c0_14 = arith.constant 0 : index
    %51 = memref.load %arg3[%c0_14] : memref<3xf32, #tpu.memory_space<smem>>
    %52 = vector.broadcast %51 : f32 to vector<8x128xf32>
    %c1_i32_15 = arith.constant 1 : i32
    %53 = vector.broadcast %c1_i32_15 : i32 to vector<8x128xi32>
    %54 = arith.cmpi eq, %50, %53 : vector<8x128xi32>
    %c1_16 = arith.constant 1 : index
    %55 = memref.load %arg3[%c1_16] : memref<3xf32, #tpu.memory_space<smem>>
    %56 = vector.broadcast %55 : f32 to vector<8x128xf32>
    %57 = arith.select %54, %56, %52 : vector<8x128xi1>, vector<8x128xf32>
    %c2_i32_17 = arith.constant 2 : i32
    %58 = vector.broadcast %c2_i32_17 : i32 to vector<8x128xi32>
    %59 = arith.cmpi eq, %50, %58 : vector<8x128xi32>
    %c2_18 = arith.constant 2 : index
    %60 = memref.load %arg3[%c2_18] : memref<3xf32, #tpu.memory_space<smem>>
    %61 = vector.broadcast %60 : f32 to vector<8x128xf32>
    %62 = arith.select %59, %61, %57 : vector<8x128xi1>, vector<8x128xf32>
    %63 = math.log %42 : vector<8x128xf32>
    %64 = arith.addf %63, %18 : vector<8x128xf32>
    %65 = arith.subf %64, %45 : vector<8x128xf32>
    %66 = arith.mulf %65, %62 : vector<8x128xf32>
    %cst_19 = arith.constant 0.000000e+00 : f32
    %67 = vector.broadcast %cst_19 : f32 to vector<8x128xf32>
    %68 = arith.select %10, %66, %67 : vector<8x128xi1>, vector<8x128xf32>
    %69 = vector.shape_cast %68 : vector<8x128xf32> to vector<1x8x128xf32>
    %c0_20 = arith.constant 0 : index
    %c0_21 = arith.constant 0 : index
    %c0_22 = arith.constant 0 : index
    %70 = vector.load %arg4[%c0_20, %c0_21, %c0_22] : memref<1x8x128xf32, #tpu.memory_space<vmem>>, vector<1x8x128xf32>
    tpu.vector_store %arg4[%c0_20, %c0_21, %c0_22], %69 {strides = array<i32>} : memref<1x8x128xf32, #tpu.memory_space<vmem>>, vector<1x8x128xf32>,
    return
  }
  func.func @transform_0(%arg0: i32) -> (i32, i32, i32) {
    %c0_i32 = arith.constant 0 : i32
    %c0_i32_0 = arith.constant 0 : i32
    %c0_i32_1 = arith.constant 0 : i32
    return %c0_i32, %arg0, %c0_i32_0 : i32, i32, i32
  }
  func.func @transform_1(%arg0: i32) -> (i32, i32) {
    %c0_i32 = arith.constant 0 : i32
    %c0_i32_0 = arith.constant 0 : i32
    return %arg0, %c0_i32 : i32, i32
  }
  func.func @transform_2(%arg0: i32) -> i32 {
    %c0_i32 = arith.constant 0 : i32
    %c0_i32_0 = arith.constant 0 : i32
    return %c0_i32 : i32
  }
  func.func @transform_3(%arg0: i32) -> (i32, i32, i32) {
    %c0_i32 = arith.constant 0 : i32
    %c0_i32_0 = arith.constant 0 : i32
    %c0_i32_1 = arith.constant 0 : i32
    return %arg0, %c0_i32, %c0_i32_0 : i32, i32, i32
  }
}

</mosaic_0001>

<llo_original>
// kernel: ordinal_weighted_ce_loss.1
$region0: #{ordinal_weighted_ce_loss.1}
  #allocation0 [shape = 'u32[]', space=smem, size = 0x4, offset = 0x4, fixed_abs, tag = 'smem constant byte address 0x4 - core index']
  #allocation1 [shape = 'u32[144,128]{1,0:T(1,128)}', space=vmem, size = 0x12000, scoped, tag = 'internal scratch']
  %s0 = inlined_call_operand.vmem [shape: f32[3,8,128], index: 0, kind: input, shape index: {}]
  %s1 = inlined_call_operand.vmem [shape: s32[8,128], index: 1, kind: input, shape index: {}]
  %s2 = inlined_call_operand.vmem [shape: f32[3], index: 2, kind: input, shape index: {}]
  %s3 = inlined_call_operand.vmem [shape: f32[1,8,128], index: 3, kind: output, shape index: {}]
  %s4 = sld [smem:[#allocation0]]
  $region26: #{ordinal_weighted_ce_loss.1} parent=0
    _
  %s6 = ssub.s32 1, %s4
  %s7 = scalar_select 0, %s6, %s4
  $region1: #{ordinal_weighted_ce_loss.1} parent=0
    #allocation2 [shape = 'u8[512]{0}', space=smem, size = 0x200, scoped, tag = 'input window, operand 2, single buffered']
    #allocation3 [shape = 's32[1]{0}', space=sflag, size = 0x4, scoped, tag = 'scoped memory for ordinal_weighted_ce_loss.1']
    %8 = vsyncpa [#allocation3], 0
    // Predicated region
    $region2: #{ordinal_weighted_ce_loss.1} parent=1 // pred_check
      _
    $region3: #{ordinal_weighted_ce_loss.1} parent=1 // pred_check_branch
      %10 = sbr.rel (0) target = $region5
    $region4: #{ordinal_weighted_ce_loss.1} parent=1 // pred_region
      _
    $region5: #{ordinal_weighted_ce_loss.1} parent=1 // pred_fallthru
      _
    // Predicated region
    $region6: #{ordinal_weighted_ce_loss.1} parent=1 // pred_check
      _
    $region7: #{ordinal_weighted_ce_loss.1} parent=1 // pred_check_branch
      %12 = sbr.rel (0) target = $region9
    $region8: #{ordinal_weighted_ce_loss.1} parent=1 // pred_region
      _
    $region9: #{ordinal_weighted_ce_loss.1} parent=1 // pred_fallthru
      _
    // Predicated region
    $region10: #{ordinal_weighted_ce_loss.1} parent=1 // pred_check
      _
    $region11: #{ordinal_weighted_ce_loss.1} parent=1 // pred_check_branch
      %14 = sbr.rel (0) target = $region13
    $region12: #{ordinal_weighted_ce_loss.1} parent=1 // pred_region
      %s16 = ssub.s32 16, 16
      %17 = vsyncadd [#allocation3], %s16
      %s19 = sshll.u32 %s2, 4
      %s20 = int_to_ptr.vmem [resolvable:$true] %s19
      %22 = dma.vmem_to_smem %s20, 16, [#allocation2], [#allocation3]
    $region13: #{ordinal_weighted_ce_loss.1} parent=1 // pred_fallthru
      _
    // Predicated region
    $region14: #{ordinal_weighted_ce_loss.1} parent=1 // pred_check
      _
    $region15: #{ordinal_weighted_ce_loss.1} parent=1 // pred_check_branch
      %24 = sbr.rel (0) target = $region17
    $region16: #{ordinal_weighted_ce_loss.1} parent=1 // pred_region
      %25 = dma.done [#allocation3], 16
    $region17: #{ordinal_weighted_ce_loss.1} parent=1 // pred_fallthru
      _
    %26 = sfence
    %v27 = vld [vmem:[%s1] sm:$0xff]
    %s28 = smul.u32 0, 8
    %v29 = vlaneseq
    %v30 = vshrl.u32 %v29, 7
    %v31 = vstv %s28
    %v32 = vadd.s32 %v31, %v30
    %v33 = vlaneseq
    %v34 = vand.u32 %v33, 127
    %v35 = vmul.u32 %v32, 128
    %v36 = vadd.s32 %v35, %v34
    %vm37 = vcmp.lt.s32.totalorder %v36, 8
    %v38 = vld [vmem:[%s0] sm:$0xff]
    %s39 = scalar_lea.vmem %s0, 8
    %v40 = vld [vmem:[%s39] sm:$0xff]
    %s41 = scalar_lea.vmem %s0, 16
    %v42 = vld [vmem:[%s41] sm:$0xff]
    %v43 = vmax.f32 %v38, %v40
    %v44 = vmax.f32 %v43, %v42
    %v45 = vsub.f32 %v42, %v44
    %v46 = vmul.f32 %v45, 1.442695
    %v47 = vpow.pop %v46
    %v48 = vadd.f32 %v47, 0.0
    %vm49 = vcmp.eq.s32.totalorder %v27, 2
    %v50 = vsel %vm49, %v42, 0.0
    %vm51 = vcmp.eq.f32.partialorder %v42, %v44
    %v52 = vsel %vm51, 2, 0
    %v53 = vsub.f32 %v40, %v44
    %v54 = vmul.f32 %v53, 1.442695
    %v55 = vpow.pop %v54
    %v56 = vadd.f32 %v48, %v55
    %vm57 = vcmp.eq.s32.totalorder %v27, 1
    %v58 = vsel %vm57, %v40, %v50
    %vm59 = vcmp.eq.f32.partialorder %v40, %v44
    %v60 = vsel %vm59, 1, %v52
    %v61 = vsub.f32 %v38, %v44
    %v62 = vmul.f32 %v61, 1.442695
    %v63 = vpow.pop %v62
    %v64 = vadd.f32 %v56, %v63
    %vm65 = vcmp.eq.s32.totalorder %v27, 0
    %v66 = vsel %vm65, %v38, %v58
    %vm67 = vcmp.eq.f32.partialorder %v38, %v44
    %v68 = vsel %vm67, 0, %v60
    %v69 = vsub.s32 %v68, %v27
    %vm70 = vcmp.lt.s32.totalorder %v69, 0
    %v71 = vsub.s32 0, %v69
    %v72 = vsel %vm70, %v71, %v69
    %s73 = sld [smem:[#allocation2]]
    %v74 = vstv %s73
    %vm75 = vcmp.eq.s32.totalorder %v72, 1
    %s76 = sld [smem:[#allocation2 + $0x1]]
    %v77 = vstv %s76
    %v78 = vsel %vm75, %v77, %v74
    %vm79 = vcmp.eq.s32.totalorder %v72, 2
    %s80 = sld [smem:[#allocation2 + $0x2]]
    %v81 = vstv %s80
    %v82 = vsel %vm79, %v81, %v78
    %v83 = vlog2.pop %v64
    %v84 = vmul.f32 %v83, 0.6931472
    %v85 = vadd.f32 %v84, %v44
    %v86 = vsub.f32 %v85, %v66
    %v87 = vmul.f32 %v86, %v82
    %v88 = vsel %vm37, %v87, 0.0
    %89 = vst [vmem:[%s3] sm:$0xff] %v88
    // Predicated region
    $region18: #{ordinal_weighted_ce_loss.1} parent=1 // pred_check
      _
    $region19: #{ordinal_weighted_ce_loss.1} parent=1 // pred_check_branch
      %91 = sbr.rel (0) target = $region21
    $region20: #{ordinal_weighted_ce_loss.1} parent=1 // pred_region
      _
    $region21: #{ordinal_weighted_ce_loss.1} parent=1 // pred_fallthru
      _
    // Predicated region
    $region22: #{ordinal_weighted_ce_loss.1} parent=1 // pred_check
      _
    $region23: #{ordinal_weighted_ce_loss.1} parent=1 // pred_check_branch
      %93 = sbr.rel (0) target = $region25
    $region24: #{ordinal_weighted_ce_loss.1} parent=1 // pred_region
      _
    $region25: #{ordinal_weighted_ce_loss.1} parent=1 // pred_fallthru
      _
    %94 = vsyncpa [#allocation3], 1

</llo_original>
